<compile_context>
chip_gen: v6e
topology: v6e:2x2x1
jax: 0.10.0
libtpu: 0.0.40
codegen_flags: <defaults>
</compile_context>

<pallas_src>
import functools

import jax
import jax.numpy as jnp
from jax.experimental import pallas as pl
from jax.experimental.pallas import tpu as pltpu

EPS = 1e-5


# --------------------------------------------------------------------------------------
# Static conv-geometry helpers (all Python ints -> fully static slices inside kernels).
# --------------------------------------------------------------------------------------

def _tap_bounds(k, *, L, L_out, padding, dilation, stride):
    """Output-column range [j_lo, j_hi] for which tap k reads a valid input column."""
    off = k * dilation - padding
    j_lo = 0 if off >= 0 else (-off + stride - 1) // stride
    j_hi = (L - 1 - off) // stride
    j_lo = max(0, min(j_lo, L_out))
    j_hi = min(L_out - 1, j_hi)
    return j_lo, j_hi


def _zero_halo(slab_ref, *, K, C_in, L, L_out, padding, dilation, stride):
    """Zero only the halo columns of each tap's row strip (the conv 'same' padding)."""
    for k in range(K):
        j_lo, j_hi = _tap_bounds(k, L=L, L_out=L_out, padding=padding,
                                 dilation=dilation, stride=stride)
        r0 = k * C_in
        if j_lo > j_hi:  # degenerate: whole strip is halo
            slab_ref[r0:r0 + C_in, :] = jnp.zeros((C_in, L_out), jnp.float32)
            continue
        if j_lo > 0:
            slab_ref[r0:r0 + C_in, 0:j_lo] = jnp.zeros((C_in, j_lo), jnp.float32)
        if j_hi < L_out - 1:
            slab_ref[r0:r0 + C_in, j_hi + 1:L_out] = jnp.zeros(
                (C_in, L_out - 1 - j_hi), jnp.float32)


def _scatter_taps(slab_ref, x_b, *, K, C_in, L, L_out, padding, dilation, stride):
    """Pack the K shifted channel views of one element into the (K*C_in, L_out) slab."""
    for k in range(K):
        j_lo, j_hi = _tap_bounds(k, L=L, L_out=L_out, padding=padding,
                                 dilation=dilation, stride=stride)
        if j_lo > j_hi:
            continue
        n = j_hi - j_lo + 1
        src = j_lo * stride + k * dilation - padding
        if stride == 1:
            v = x_b[:, src:src + n]
        else:  # strided register slice; only taken for stride > 1 configurations
            v = x_b[:, src:src + (n - 1) * stride + 1:stride]
        r0 = k * C_in
        slab_ref[r0:r0 + C_in, j_lo:j_lo + n] = v


# --------------------------------------------------------------------------------------
# Pass 1: conv (no bias) -> per-element BN partial statistics (sum + centered sum-sq).
# --------------------------------------------------------------------------------------

def conv_stats_kernel(x_ref, w_ref, sum_ref, m2_ref, slab_ref, *,
                      B_BLK, K, C_in, L, L_out, padding, dilation, stride):
    """
    x_ref:   (B_BLK, C_in, L)      native NCL input block
    w_ref:   (C_out, K*C_in)       packed im2col weight (column = k*C_in + c)
    sum_ref: (B_BLK, C_out, 1)     per-element sum over L_out
    m2_ref:  (B_BLK, C_out, 1)     per-element sum of (y - mean_elem)^2
    slab_ref:(K*C_in, L_out)       VMEM scratch, packed im2col slab
    """
    _zero_halo(slab_ref, K=K, C_in=C_in, L=L, L_out=L_out,
               padding=padding, dilation=dilation, stride=stride)
    inv_cnt = 1.0 / float(L_out)
    for b in range(B_BLK):
        _scatter_taps(slab_ref, x_ref[b], K=K, C_in=C_in, L=L, L_out=L_out,
                      padding=padding, dilation=dilation, stride=stride)
        acc = jnp.dot(w_ref[...], slab_ref[...],
                      preferred_element_type=jnp.float32)          # (C_out, L_out)
        s = jnp.sum(acc, axis=1, keepdims=True)                     # (C_out, 1)
        d = acc - s * inv_cnt                                       # centered (stable var)
        sum_ref[b] = s
        m2_ref[b] = jnp.sum(d * d, axis=1, keepdims=True)


# --------------------------------------------------------------------------------------
# Pass 2: recompute conv with BN scale folded into the weight, add shift, ReLU, store NCL.
# --------------------------------------------------------------------------------------

def conv_bn_relu_kernel(x_ref, w_ref, shift_ref, o_ref, slab_ref, *,
                        B_BLK, K, C_in, L, L_out, padding, dilation, stride):
    """
    w_ref:     (C_out, K*C_in)   scale-folded weight
    shift_ref: (C_out, 1)        folded BN shift (beta - mean*scale)
    o_ref:     (B_BLK, C_out, L_out)  final output, module-native layout
    """
    _zero_halo(slab_ref, K=K, C_in=C_in, L=L, L_out=L_out,
               padding=padding, dilation=dilation, stride=stride)
    for b in range(B_BLK):
        _scatter_taps(slab_ref, x_ref[b], K=K, C_in=C_in, L=L, L_out=L_out,
                      padding=padding, dilation=dilation, stride=stride)
        acc = jnp.dot(w_ref[...], slab_ref[...],
                      preferred_element_type=jnp.float32)           # (C_out, L_out)
        o_ref[b] = jnp.maximum(acc + shift_ref[...], 0.0)


# --------------------------------------------------------------------------------------
# Wrapper
# --------------------------------------------------------------------------------------

def _pick_batch_block(N, per_elem_bytes, max_bytes=4 << 20, max_blk=8):
    """Largest divisor of N that keeps the per-step block small and (when possible)
    leaves >= 2 grid steps so both v7x TensorCores get work."""
    best = 1
    for d in range(1, min(N, max_blk) + 1):
        if N % d:
            continue
        if d * per_elem_bytes > max_bytes:
            continue
        if N // d >= 2 or (N == 1 and d == 1):
            best = d
    return best


@functools.partial(jax.jit, static_argnames=("padding", "dilation", "stride"))
def block_forward(x, w, b, gamma, beta, *, padding=2, dilation=1, stride=1):
    """x: (N, C_in, L) f32 (PyTorch NCL). w: (C_out, C_in, K). Returns (N, C_out, L_out)."""
    del b  # Conv bias is a provable no-op under training-mode BatchNorm.
    N, C_in, L = x.shape
    C_out, _, K = w.shape
    L_out = (L + 2 * padding - dilation * (K - 1) - 1) // stride + 1
    KC = K * C_in

    x = x.astype(jnp.float32)
    # Packed im2col weight, column index = k*C_in + c (contraction is exactly K*C_in).
    w_pk = jnp.transpose(w, (0, 2, 1)).reshape(C_out, KC).astype(jnp.float32)

    per_elem_bytes = 4 * (C_in * L + C_out * L_out)
    b_blk = _pick_batch_block(N, per_elem_bytes)
    grid = (N // b_blk,)

    static = dict(B_BLK=b_blk, K=K, C_in=C_in, L=L, L_out=L_out,
                  padding=padding, dilation=dilation, stride=stride)

    # ---- Pass 1: BN partial statistics only (no conv intermediate written to HBM). ----
    sums, m2s = pl.pallas_call(
        functools.partial(conv_stats_kernel, **static),
        out_shape=(jax.ShapeDtypeStruct((N, C_out, 1), jnp.float32),
                   jax.ShapeDtypeStruct((N, C_out, 1), jnp.float32)),
        grid=grid,
        in_specs=[
            pl.BlockSpec((b_blk, C_in, L), lambda i: (i, 0, 0)),
            pl.BlockSpec((C_out, KC), lambda i: (0, 0)),
        ],
        out_specs=(
            pl.BlockSpec((b_blk, C_out, 1), lambda i: (i, 0, 0)),
            pl.BlockSpec((b_blk, C_out, 1), lambda i: (i, 0, 0)),
        ),
        scratch_shapes=[pltpu.VMEM((KC, L_out), jnp.float32)],
        compiler_params=pltpu.CompilerParams(dimension_semantics=("parallel",)),
    )(x, w_pk)

    # ---- Tiny XLA fold: Chan's parallel-variance combine -> folded scale / shift. ----
    cnt = jnp.float32(L_out)
    total = jnp.float32(N * L_out)
    s2 = sums[:, :, 0]                                   # (N, C_out)
    q2 = m2s[:, :, 0]                                    # (N, C_out)
    mu_b = s2 / cnt
    mean = jnp.sum(s2, axis=0) / total
    m2_tot = jnp.sum(q2, axis=0) + cnt * jnp.sum((mu_b - mean[None, :]) ** 2, axis=0)
    var = jnp.maximum(m2_tot / total, 0.0)
    inv = jax.lax.rsqrt(var + EPS)
    scale = gamma.astype(jnp.float32) * inv              # (C_out,)
    shift = (beta.astype(jnp.float32) - mean * scale)[:, None]   # (C_out, 1)
    w_scaled = w_pk * scale[:, None]                     # fold BN scale into the weight

    # ---- Pass 2: fused conv + BN(shift) + ReLU, written directly in NCL layout. ----
    out = pl.pallas_call(
        functools.partial(conv_bn_relu_kernel, **static),
        out_shape=jax.ShapeDtypeStruct((N, C_out, L_out), jnp.float32),
        grid=grid,
        in_specs=[
            pl.BlockSpec((b_blk, C_in, L), lambda i: (i, 0, 0)),
            pl.BlockSpec((C_out, KC), lambda i: (0, 0)),
            pl.BlockSpec((C_out, 1), lambda i: (0, 0)),
        ],
        out_specs=pl.BlockSpec((b_blk, C_out, L_out), lambda i: (i, 0, 0)),
        scratch_shapes=[pltpu.VMEM((KC, L_out), jnp.float32)],
        compiler_params=pltpu.CompilerParams(dimension_semantics=("parallel",)),
    )(x, w_scaled, shift)

    return out


def _reference(x, w, b, gamma, beta, *, padding=2, dilation=1, stride=1):
    """Pure-JAX reference (conv + train-mode BN + relu) for validation."""
    y = jax.lax.conv_general_dilated(
        x, w, window_strides=(stride,), padding=[(padding, padding)],
        rhs_dilation=(dilation,), dimension_numbers=("NCH", "OIH", "NCH"))
    y = y + b[None, :, None]
    mean = jnp.mean(y, axis=(0, 2), keepdims=True)
    var = jnp.mean((y - mean) ** 2, axis=(0, 2), keepdims=True)
    y = (y - mean) * jax.lax.rsqrt(var + EPS)
    y = y * gamma[None, :, None] + beta[None, :, None]
    return jnp.maximum(y, 0.0)


if __name__ == "__main__":
    key = jax.random.PRNGKey(0)
    k_x, k_w, k_b, k_g, k_be = jax.random.split(key, 5)

    N, C_in, C_out, L, K = 2, 4, 8, 16, 5

    x = jax.random.normal(k_x, (N, C_in, L), dtype=jnp.float32)

    # Deterministic parameter init (shapes per nn.Conv1d / nn.BatchNorm1d);
    # gamma/beta made non-trivial to exercise the folded affine path.
    bound = 1.0 / (C_in * K) ** 0.5
    w = jax.random.uniform(k_w, (C_out, C_in, K), jnp.float32, -bound, bound)
    b = jax.random.uniform(k_b, (C_out,), jnp.float32, -bound, bound)
    gamma = jax.random.uniform(k_g, (C_out,), jnp.float32, 0.5, 1.5)
    beta = jax.random.uniform(k_be, (C_out,), jnp.float32, -0.5, 0.5)

    out = jax.block_until_ready(block_forward(x, w, b, gamma, beta))
    ref = jax.block_until_ready(_reference(x, w, b, gamma, beta))

    assert out.shape == (N, C_out, L), out.shape
    max_err = float(jnp.max(jnp.abs(out - ref)))
    assert jnp.allclose(out, ref, atol=2e-3, rtol=2e-3), max_err

    print("KERNEL_OK")
</pallas_src>

<mosaic_0001>
module attributes {stable_mosaic.version = 11 : i64} {
  func.func @conv_stats_kernel(%arg0: i32, %arg1: memref<1x4x16xf32, #tpu.memory_space<vmem>>, %arg2: memref<8x20xf32, #tpu.memory_space<vmem>>, %arg3: memref<1x8x1xf32, #tpu.memory_space<vmem>>, %arg4: memref<1x8x1xf32, #tpu.memory_space<vmem>>, %arg5: memref<20x16xf32, #tpu.memory_space<vmem>>) attributes {dimension_semantics = [#tpu.dimension_semantics<parallel>], iteration_bounds = array<i64: 2>, scalar_prefetch = 0 : i64, scratch_operands = 1 : i64, tpu.core_type = #tpu.core_type<tc>, window_params = [{transform_indices = @transform_0, window_bounds = array<i64: 1, 4, 16>}, {pipeline_mode = #tpu.pipeline_mode<synchronous>, transform_indices = @transform_1, window_bounds = array<i64: 8, 20>}, {transform_indices = @transform_2, window_bounds = array<i64: 1, 8, 1>}, {transform_indices = @transform_3, window_bounds = array<i64: 1, 8, 1>}]} {
    %cst = arith.constant 0.000000e+00 : f32
    %0 = vector.broadcast %cst : f32 to vector<4x2xf32>
    %c0 = arith.constant 0 : index
    %c0_0 = arith.constant 0 : index
    %1 = vector.load %arg5[%c0, %c0_0] : memref<20x16xf32, #tpu.memory_space<vmem>>, vector<4x2xf32>
    tpu.vector_store %arg5[%c0, %c0_0], %0 {strides = array<i32>} : memref<20x16xf32, #tpu.memory_space<vmem>>, vector<4x2xf32>,
    %cst_1 = arith.constant 0.000000e+00 : f32
    %2 = vector.broadcast %cst_1 : f32 to vector<4x1xf32>
    %c4 = arith.constant 4 : index
    %c0_2 = arith.constant 0 : index
    %3 = vector.load %arg5[%c4, %c0_2] : memref<20x16xf32, #tpu.memory_space<vmem>>, vector<4x1xf32>
    tpu.vector_store %arg5[%c4, %c0_2], %2 {strides = array<i32>} : memref<20x16xf32, #tpu.memory_space<vmem>>, vector<4x1xf32>,
    %cst_3 = arith.constant 0.000000e+00 : f32
    %4 = vector.broadcast %cst_3 : f32 to vector<4x1xf32>
    %c12 = arith.constant 12 : index
    %c15 = arith.constant 15 : index
    %5 = vector.load %arg5[%c12, %c15] : memref<20x16xf32, #tpu.memory_space<vmem>>, vector<4x1xf32>
    tpu.vector_store %arg5[%c12, %c15], %4 {strides = array<i32>} : memref<20x16xf32, #tpu.memory_space<vmem>>, vector<4x1xf32>,
    %cst_4 = arith.constant 0.000000e+00 : f32
    %6 = vector.broadcast %cst_4 : f32 to vector<4x2xf32>
    %c16 = arith.constant 16 : index
    %c14 = arith.constant 14 : index
    %7 = vector.load %arg5[%c16, %c14] : memref<20x16xf32, #tpu.memory_space<vmem>>, vector<4x2xf32>
    tpu.vector_store %arg5[%c16, %c14], %6 {strides = array<i32>} : memref<20x16xf32, #tpu.memory_space<vmem>>, vector<4x2xf32>,
    %c0_5 = arith.constant 0 : index
    %c0_6 = arith.constant 0 : index
    %c0_7 = arith.constant 0 : index
    %8 = vector.load %arg1[%c0_5, %c0_6, %c0_7] : memref<1x4x16xf32, #tpu.memory_space<vmem>>, vector<1x4x16xf32>
    %9 = vector.shape_cast %8 : vector<1x4x16xf32> to vector<4x16xf32>
    %10 = vector.extract_strided_slice %9 {offsets = [0, 0], sizes = [4, 14], strides = [1, 1]} : vector<4x16xf32> to vector<4x14xf32>
    %c0_8 = arith.constant 0 : index
    %c2 = arith.constant 2 : index
    %11 = vector.load %arg5[%c0_8, %c2] : memref<20x16xf32, #tpu.memory_space<vmem>>, vector<4x14xf32>
    tpu.vector_store %arg5[%c0_8, %c2], %10 {strides = array<i32>} : memref<20x16xf32, #tpu.memory_space<vmem>>, vector<4x14xf32>,
    %12 = vector.extract_strided_slice %9 {offsets = [0, 0], sizes = [4, 15], strides = [1, 1]} : vector<4x16xf32> to vector<4x15xf32>
    %c4_9 = arith.constant 4 : index
    %c1 = arith.constant 1 : index
    %13 = vector.load %arg5[%c4_9, %c1] : memref<20x16xf32, #tpu.memory_space<vmem>>, vector<4x15xf32>
    tpu.vector_store %arg5[%c4_9, %c1], %12 {strides = array<i32>} : memref<20x16xf32, #tpu.memory_space<vmem>>, vector<4x15xf32>,
    %c8 = arith.constant 8 : index
    %c0_10 = arith.constant 0 : index
    %14 = vector.load %arg5[%c8, %c0_10] : memref<20x16xf32, #tpu.memory_space<vmem>>, vector<4x16xf32>
    tpu.vector_store %arg5[%c8, %c0_10], %9 {strides = array<i32>} : memref<20x16xf32, #tpu.memory_space<vmem>>, vector<4x16xf32>,
    %15 = vector.extract_strided_slice %9 {offsets = [0, 1], sizes = [4, 15], strides = [1, 1]} : vector<4x16xf32> to vector<4x15xf32>
    %c12_11 = arith.constant 12 : index
    %c0_12 = arith.constant 0 : index
    %16 = vector.load %arg5[%c12_11, %c0_12] : memref<20x16xf32, #tpu.memory_space<vmem>>, vector<4x15xf32>
    tpu.vector_store %arg5[%c12_11, %c0_12], %15 {strides = array<i32>} : memref<20x16xf32, #tpu.memory_space<vmem>>, vector<4x15xf32>,
    %17 = vector.extract_strided_slice %9 {offsets = [0, 2], sizes = [4, 14], strides = [1, 1]} : vector<4x16xf32> to vector<4x14xf32>
    %c16_13 = arith.constant 16 : index
    %c0_14 = arith.constant 0 : index
    %18 = vector.load %arg5[%c16_13, %c0_14] : memref<20x16xf32, #tpu.memory_space<vmem>>, vector<4x14xf32>
    tpu.vector_store %arg5[%c16_13, %c0_14], %17 {strides = array<i32>} : memref<20x16xf32, #tpu.memory_space<vmem>>, vector<4x14xf32>,
    %c0_15 = arith.constant 0 : index
    %c0_16 = arith.constant 0 : index
    %19 = vector.load %arg2[%c0_15, %c0_16] : memref<8x20xf32, #tpu.memory_space<vmem>>, vector<8x20xf32>
    %c0_17 = arith.constant 0 : index
    %c0_18 = arith.constant 0 : index
    %20 = vector.load %arg5[%c0_17, %c0_18] : memref<20x16xf32, #tpu.memory_space<vmem>>, vector<20x16xf32>
    %cst_19 = arith.constant dense<0.000000e+00> : vector<8x16xf32>
    %21 = tpu.matmul %19, %20, %cst_19 {dimension_numbers = #tpu.dot_dimension_numbers<[1], [0], [0], [1], [0, 0, 1, 1], [], []>} : vector<8x20xf32>, vector<20x16xf32>, vector<8x16xf32> -> vector<8x16xf32>
    %cst_20 = arith.constant dense<0.000000e+00> : vector<8xf32>
    %22 = vector.multi_reduction <add>, %21, %cst_20 [1] : vector<8x16xf32> to vector<8xf32>
    %23 = vector.shape_cast %22 : vector<8xf32> to vector<8x1xf32>
    %cst_21 = arith.constant 6.250000e-02 : f32
    %24 = vector.broadcast %cst_21 : f32 to vector<8x1xf32>
    %25 = arith.mulf %23, %24 : vector<8x1xf32>
    %26 = vector.broadcast %25 : vector<8x1xf32> to vector<8x16xf32>
    %27 = arith.subf %21, %26 : vector<8x16xf32>
    %c0_22 = arith.constant 0 : index
    %c0_23 = arith.constant 0 : index
    %c0_24 = arith.constant 0 : index
    %28 = vector.load %arg3[%c0_22, %c0_23, %c0_24] : memref<1x8x1xf32, #tpu.memory_space<vmem>>, vector<1x8x1xf32>
    %29 = vector.shape_cast %28 : vector<1x8x1xf32> to vector<8x1xf32>
    %30 = vector.shape_cast %23 : vector<8x1xf32> to vector<1x8x1xf32>
    tpu.vector_store %arg3[%c0_22, %c0_23, %c0_24], %30 {strides = array<i32>} : memref<1x8x1xf32, #tpu.memory_space<vmem>>, vector<1x8x1xf32>,
    %31 = arith.mulf %27, %27 : vector<8x16xf32>
    %cst_25 = arith.constant dense<0.000000e+00> : vector<8xf32>
    %32 = vector.multi_reduction <add>, %31, %cst_25 [1] : vector<8x16xf32> to vector<8xf32>
    %33 = vector.shape_cast %32 : vector<8xf32> to vector<8x1xf32>
    %c0_26 = arith.constant 0 : index
    %c0_27 = arith.constant 0 : index
    %c0_28 = arith.constant 0 : index
    %34 = vector.load %arg4[%c0_26, %c0_27, %c0_28] : memref<1x8x1xf32, #tpu.memory_space<vmem>>, vector<1x8x1xf32>
    %35 = vector.shape_cast %34 : vector<1x8x1xf32> to vector<8x1xf32>
    %36 = vector.shape_cast %33 : vector<8x1xf32> to vector<1x8x1xf32>
    tpu.vector_store %arg4[%c0_26, %c0_27, %c0_28], %36 {strides = array<i32>} : memref<1x8x1xf32, #tpu.memory_space<vmem>>, vector<1x8x1xf32>,
    return
  }
  func.func @transform_0(%arg0: i32) -> (i32, i32, i32) {
    %c0_i32 = arith.constant 0 : i32
    %c0_i32_0 = arith.constant 0 : i32
    %c0_i32_1 = arith.constant 0 : i32
    return %arg0, %c0_i32, %c0_i32_0 : i32, i32, i32
  }
  func.func @transform_1(%arg0: i32) -> (i32, i32) {
    %c0_i32 = arith.constant 0 : i32
    %c0_i32_0 = arith.constant 0 : i32
    %c0_i32_1 = arith.constant 0 : i32
    return %c0_i32, %c0_i32_0 : i32, i32
  }
  func.func @transform_2(%arg0: i32) -> (i32, i32, i32) {
    %c0_i32 = arith.constant 0 : i32
    %c0_i32_0 = arith.constant 0 : i32
    %c0_i32_1 = arith.constant 0 : i32
    return %arg0, %c0_i32, %c0_i32_0 : i32, i32, i32
  }
  func.func @transform_3(%arg0: i32) -> (i32, i32, i32) {
    %c0_i32 = arith.constant 0 : i32
    %c0_i32_0 = arith.constant 0 : i32
    %c0_i32_1 = arith.constant 0 : i32
    return %arg0, %c0_i32, %c0_i32_0 : i32, i32, i32
  }
}

module attributes {stable_mosaic.version = 11 : i64} {
  func.func @conv_bn_relu_kernel(%arg0: i32, %arg1: memref<1x4x16xf32, #tpu.memory_space<vmem>>, %arg2: memref<8x20xf32, #tpu.memory_space<vmem>>, %arg3: memref<8x1xf32, #tpu.memory_space<vmem>>, %arg4: memref<1x8x16xf32, #tpu.memory_space<vmem>>, %arg5: memref<20x16xf32, #tpu.memory_space<vmem>>) attributes {dimension_semantics = [#tpu.dimension_semantics<parallel>], iteration_bounds = array<i64: 2>, scalar_prefetch = 0 : i64, scratch_operands = 1 : i64, tpu.core_type = #tpu.core_type<tc>, window_params = [{transform_indices = @transform_0, window_bounds = array<i64: 1, 4, 16>}, {pipeline_mode = #tpu.pipeline_mode<synchronous>, transform_indices = @transform_1, window_bounds = array<i64: 8, 20>}, {pipeline_mode = #tpu.pipeline_mode<synchronous>, transform_indices = @transform_2, window_bounds = array<i64: 8, 1>}, {transform_indices = @transform_3, window_bounds = array<i64: 1, 8, 16>}]} {
    %cst = arith.constant 0.000000e+00 : f32
    %0 = vector.broadcast %cst : f32 to vector<4x2xf32>
    %c0 = arith.constant 0 : index
    %c0_0 = arith.constant 0 : index
    %1 = vector.load %arg5[%c0, %c0_0] : memref<20x16xf32, #tpu.memory_space<vmem>>, vector<4x2xf32>
    tpu.vector_store %arg5[%c0, %c0_0], %0 {strides = array<i32>} : memref<20x16xf32, #tpu.memory_space<vmem>>, vector<4x2xf32>,
    %cst_1 = arith.constant 0.000000e+00 : f32
    %2 = vector.broadcast %cst_1 : f32 to vector<4x1xf32>
    %c4 = arith.constant 4 : index
    %c0_2 = arith.constant 0 : index
    %3 = vector.load %arg5[%c4, %c0_2] : memref<20x16xf32, #tpu.memory_space<vmem>>, vector<4x1xf32>
    tpu.vector_store %arg5[%c4, %c0_2], %2 {strides = array<i32>} : memref<20x16xf32, #tpu.memory_space<vmem>>, vector<4x1xf32>,
    %cst_3 = arith.constant 0.000000e+00 : f32
    %4 = vector.broadcast %cst_3 : f32 to vector<4x1xf32>
    %c12 = arith.constant 12 : index
    %c15 = arith.constant 15 : index
    %5 = vector.load %arg5[%c12, %c15] : memref<20x16xf32, #tpu.memory_space<vmem>>, vector<4x1xf32>
    tpu.vector_store %arg5[%c12, %c15], %4 {strides = array<i32>} : memref<20x16xf32, #tpu.memory_space<vmem>>, vector<4x1xf32>,
    %cst_4 = arith.constant 0.000000e+00 : f32
    %6 = vector.broadcast %cst_4 : f32 to vector<4x2xf32>
    %c16 = arith.constant 16 : index
    %c14 = arith.constant 14 : index
    %7 = vector.load %arg5[%c16, %c14] : memref<20x16xf32, #tpu.memory_space<vmem>>, vector<4x2xf32>
    tpu.vector_store %arg5[%c16, %c14], %6 {strides = array<i32>} : memref<20x16xf32, #tpu.memory_space<vmem>>, vector<4x2xf32>,
    %c0_5 = arith.constant 0 : index
    %c0_6 = arith.constant 0 : index
    %c0_7 = arith.constant 0 : index
    %8 = vector.load %arg1[%c0_5, %c0_6, %c0_7] : memref<1x4x16xf32, #tpu.memory_space<vmem>>, vector<1x4x16xf32>
    %9 = vector.shape_cast %8 : vector<1x4x16xf32> to vector<4x16xf32>
    %10 = vector.extract_strided_slice %9 {offsets = [0, 0], sizes = [4, 14], strides = [1, 1]} : vector<4x16xf32> to vector<4x14xf32>
    %c0_8 = arith.constant 0 : index
    %c2 = arith.constant 2 : index
    %11 = vector.load %arg5[%c0_8, %c2] : memref<20x16xf32, #tpu.memory_space<vmem>>, vector<4x14xf32>
    tpu.vector_store %arg5[%c0_8, %c2], %10 {strides = array<i32>} : memref<20x16xf32, #tpu.memory_space<vmem>>, vector<4x14xf32>,
    %12 = vector.extract_strided_slice %9 {offsets = [0, 0], sizes = [4, 15], strides = [1, 1]} : vector<4x16xf32> to vector<4x15xf32>
    %c4_9 = arith.constant 4 : index
    %c1 = arith.constant 1 : index
    %13 = vector.load %arg5[%c4_9, %c1] : memref<20x16xf32, #tpu.memory_space<vmem>>, vector<4x15xf32>
    tpu.vector_store %arg5[%c4_9, %c1], %12 {strides = array<i32>} : memref<20x16xf32, #tpu.memory_space<vmem>>, vector<4x15xf32>,
    %c8 = arith.constant 8 : index
    %c0_10 = arith.constant 0 : index
    %14 = vector.load %arg5[%c8, %c0_10] : memref<20x16xf32, #tpu.memory_space<vmem>>, vector<4x16xf32>
    tpu.vector_store %arg5[%c8, %c0_10], %9 {strides = array<i32>} : memref<20x16xf32, #tpu.memory_space<vmem>>, vector<4x16xf32>,
    %15 = vector.extract_strided_slice %9 {offsets = [0, 1], sizes = [4, 15], strides = [1, 1]} : vector<4x16xf32> to vector<4x15xf32>
    %c12_11 = arith.constant 12 : index
    %c0_12 = arith.constant 0 : index
    %16 = vector.load %arg5[%c12_11, %c0_12] : memref<20x16xf32, #tpu.memory_space<vmem>>, vector<4x15xf32>
    tpu.vector_store %arg5[%c12_11, %c0_12], %15 {strides = array<i32>} : memref<20x16xf32, #tpu.memory_space<vmem>>, vector<4x15xf32>,
    %17 = vector.extract_strided_slice %9 {offsets = [0, 2], sizes = [4, 14], strides = [1, 1]} : vector<4x16xf32> to vector<4x14xf32>
    %c16_13 = arith.constant 16 : index
    %c0_14 = arith.constant 0 : index
    %18 = vector.load %arg5[%c16_13, %c0_14] : memref<20x16xf32, #tpu.memory_space<vmem>>, vector<4x14xf32>
    tpu.vector_store %arg5[%c16_13, %c0_14], %17 {strides = array<i32>} : memref<20x16xf32, #tpu.memory_space<vmem>>, vector<4x14xf32>,
    %c0_15 = arith.constant 0 : index
    %c0_16 = arith.constant 0 : index
    %19 = vector.load %arg2[%c0_15, %c0_16] : memref<8x20xf32, #tpu.memory_space<vmem>>, vector<8x20xf32>
    %c0_17 = arith.constant 0 : index
    %c0_18 = arith.constant 0 : index
    %20 = vector.load %arg5[%c0_17, %c0_18] : memref<20x16xf32, #tpu.memory_space<vmem>>, vector<20x16xf32>
    %cst_19 = arith.constant dense<0.000000e+00> : vector<8x16xf32>
    %21 = tpu.matmul %19, %20, %cst_19 {dimension_numbers = #tpu.dot_dimension_numbers<[1], [0], [0], [1], [0, 0, 1, 1], [], []>} : vector<8x20xf32>, vector<20x16xf32>, vector<8x16xf32> -> vector<8x16xf32>
    %c0_20 = arith.constant 0 : index
    %c0_21 = arith.constant 0 : index
    %22 = vector.load %arg3[%c0_20, %c0_21] : memref<8x1xf32, #tpu.memory_space<vmem>>, vector<8x1xf32>
    %23 = vector.broadcast %22 : vector<8x1xf32> to vector<8x16xf32>
    %24 = arith.addf %21, %23 : vector<8x16xf32>
    %cst_22 = arith.constant 0.000000e+00 : f32
    %25 = vector.broadcast %cst_22 : f32 to vector<8x16xf32>
    %26 = arith.maximumf %24, %25 : vector<8x16xf32>
    %c0_23 = arith.constant 0 : index
    %c0_24 = arith.constant 0 : index
    %c0_25 = arith.constant 0 : index
    %27 = vector.load %arg4[%c0_23, %c0_24, %c0_25] : memref<1x8x16xf32, #tpu.memory_space<vmem>>, vector<1x8x16xf32>
    %28 = vector.shape_cast %27 : vector<1x8x16xf32> to vector<8x16xf32>
    %29 = vector.shape_cast %26 : vector<8x16xf32> to vector<1x8x16xf32>
    tpu.vector_store %arg4[%c0_23, %c0_24, %c0_25], %29 {strides = array<i32>} : memref<1x8x16xf32, #tpu.memory_space<vmem>>, vector<1x8x16xf32>,
    return
  }
  func.func @transform_0(%arg0: i32) -> (i32, i32, i32) {
    %c0_i32 = arith.constant 0 : i32
    %c0_i32_0 = arith.constant 0 : i32
    %c0_i32_1 = arith.constant 0 : i32
    return %arg0, %c0_i32, %c0_i32_0 : i32, i32, i32
  }
  func.func @transform_1(%arg0: i32) -> (i32, i32) {
    %c0_i32 = arith.constant 0 : i32
    %c0_i32_0 = arith.constant 0 : i32
    %c0_i32_1 = arith.constant 0 : i32
    return %c0_i32, %c0_i32_0 : i32, i32
  }
  func.func @transform_2(%arg0: i32) -> (i32, i32) {
    %c0_i32 = arith.constant 0 : i32
    %c0_i32_0 = arith.constant 0 : i32
    %c0_i32_1 = arith.constant 0 : i32
    return %c0_i32, %c0_i32_0 : i32, i32
  }
  func.func @transform_3(%arg0: i32) -> (i32, i32, i32) {
    %c0_i32 = arith.constant 0 : i32
    %c0_i32_0 = arith.constant 0 : i32
    %c0_i32_1 = arith.constant 0 : i32
    return %arg0, %c0_i32, %c0_i32_0 : i32, i32, i32
  }
}

</mosaic_0001>

<llo_original>
// kernel: block_forward.2
$region0: #{block_forward.2}
  #allocation0 [shape = 'u32[]', space=smem, size = 0x4, offset = 0x4, fixed_abs, tag = 'smem constant byte address 0x4 - core index']
  #allocation1 [shape = 'u32[144,128]{1,0:T(1,128)}', space=vmem, size = 0x12000, scoped, tag = 'internal scratch']
  #allocation2 [shape = 'f32[20,16]{1,0:T(8,128)}', space=vmem, size = 0x3000, scoped, tag = 'scratch operand']
  %s0 = inlined_call_operand.vmem [shape: f32[2,4,16], index: 0, kind: input, shape index: {}]
  %s1 = inlined_call_operand.vmem [shape: f32[8,20], index: 1, kind: input, shape index: {}]
  %s2 = inlined_call_operand.vmem [shape: f32[2,8,1], index: 2, kind: output, shape index: {0}]
  %s3 = inlined_call_operand.vmem [shape: f32[2,8,1], index: 3, kind: output, shape index: {1}]
  %4 = xla_tuple %s2, %s3
  %s5 = sld [smem:[#allocation0]]
  $region49: #{block_forward.2} parent=0
    _
  %s7 = ssub.s32 1, %s5
  %s8 = scalar_select 0, %s7, %s5
  loop: start=0, step=1, limit=4
  $region2: #{block_forward.2} parent=0 // loop_pre_header
    _
  $region3: #{block_forward.2} parent=0 // loop_header
    %s10 = sphi 0, %s14
    %p11 = scmp.ge.s32.totalorder %s10, 4
    %s20 = sphi 0, %s22
    %s23 = sphi 0, %s20
    %s24 = sphi 0, %s23
    %s40 = sphi 0, %s24
    %s44 = sphi 0, %s44
    %s46 = sphi 0, %s44
    %s47 = sphi 0, %s46
    %s61 = sphi 0, %s47
    %s67 = sphi 0, %s69
    %s70 = sphi 0, %s67
    %s71 = sphi 0, %s70
    %s87 = sphi 0, %s71
    %s93 = sphi 0, %s95
    %s96 = sphi 0, %s93
    %s97 = sphi 0, %s96
    %s113 = sphi 0, %s97
  $region4: #{block_forward.2} parent=0 // loop_header_branch
    %13 = sbr.rel (%p11) target = $region8
  $region5: #{block_forward.2} parent=0 // loop_body
    %s15 = ssub.s32 %s10, 1
    %s16 = ssub.s32 %s10, 2
    %s17 = sadd.s32 %s10, 1
    %s18 = ssub.s32 %s10, %s17
    %p19 = scmp.eq.s32.totalorder %s18, 0
    %s21 = sadd.s32 %s20, 1
    %s22 = scalar_select %p19, %s20, %s21
    %p25 = pneg %p19
    %p26 = scmp.eq.s32.totalorder %s10, 1
    %p27 = por %p25, %p26
    %p28 = scmp.ne.s32.totalorder %s20, %s23
    %p29 = scmp.eq.s32.totalorder %s10, 0
    %p30 = por %p28, %p29
    %p31 = scmp.ne.s32.totalorder %s20, %s23
    %p32 = scmp.eq.s32.totalorder %s15, 1
    %p33 = por %p31, %p32
    %p34 = scmp.ne.s32.totalorder %s23, %s24
    %p35 = scmp.eq.s32.totalorder %s15, 0
    %p36 = por %p34, %p35
    %p37 = scmp.ne.s32.totalorder %s23, %s24
    %p38 = scmp.eq.s32.totalorder %s16, 1
    %p39 = por %p37, %p38
    %p41 = scmp.ne.s32.totalorder %s24, %s40
    %p42 = scmp.eq.s32.totalorder %s16, 0
    %p43 = por %p41, %p42
    %s45 = sadd.s32 %s44, 1
    %p48 = scmp.eq.s32.totalorder %s10, 1
    %p49 = scmp.ne.s32.totalorder %s44, %s46
    %p50 = scmp.eq.s32.totalorder %s10, 0
    %p51 = por %p49, %p50
    %p52 = scmp.ne.s32.totalorder %s44, %s46
    %p53 = scmp.eq.s32.totalorder %s15, 1
    %p54 = por %p52, %p53
    %p55 = scmp.ne.s32.totalorder %s46, %s47
    %p56 = scmp.eq.s32.totalorder %s15, 0
    %p57 = por %p55, %p56
    %p58 = scmp.ne.s32.totalorder %s46, %s47
    %p59 = scmp.eq.s32.totalorder %s16, 1
    %p60 = por %p58, %p59
    %p62 = scmp.ne.s32.totalorder %s47, %s61
    %p63 = scmp.eq.s32.totalorder %s16, 0
    %p64 = por %p62, %p63
    %s65 = ssub.s32 %s10, %s17
    %p66 = scmp.eq.s32.totalorder %s65, 0
    %s68 = sadd.s32 %s67, 1
    %s69 = scalar_select %p66, %s67, %s68
    %p72 = pneg %p66
    %p73 = scmp.eq.s32.totalorder %s10, 1
    %p74 = por %p72, %p73
    %p75 = scmp.ne.s32.totalorder %s67, %s70
    %p76 = scmp.eq.s32.totalorder %s10, 0
    %p77 = por %p75, %p76
    %p78 = scmp.ne.s32.totalorder %s67, %s70
    %p79 = scmp.eq.s32.totalorder %s15, 1
    %p80 = por %p78, %p79
    %p81 = scmp.ne.s32.totalorder %s70, %s71
    %p82 = scmp.eq.s32.totalorder %s15, 0
    %p83 = por %p81, %p82
    %p84 = scmp.ne.s32.totalorder %s70, %s71
    %p85 = scmp.eq.s32.totalorder %s16, 1
    %p86 = por %p84, %p85
    %p88 = scmp.ne.s32.totalorder %s71, %s87
    %p89 = scmp.eq.s32.totalorder %s16, 0
    %p90 = por %p88, %p89
    %s91 = ssub.s32 %s10, %s17
    %p92 = scmp.eq.s32.totalorder %s91, 0
    %s94 = sadd.s32 %s93, 1
    %s95 = scalar_select %p92, %s93, %s94
    %p98 = pneg %p92
    %p99 = scmp.eq.s32.totalorder %s10, 1
    %p100 = por %p98, %p99
    %p101 = scmp.ne.s32.totalorder %s93, %s96
    %p102 = scmp.eq.s32.totalorder %s10, 0
    %p103 = por %p101, %p102
    %p104 = scmp.ne.s32.totalorder %s93, %s96
    %p105 = scmp.eq.s32.totalorder %s15, 1
    %p106 = por %p104, %p105
    %p107 = scmp.ne.s32.totalorder %s96, %s97
    %p108 = scmp.eq.s32.totalorder %s15, 0
    %p109 = por %p107, %p108
    %p110 = scmp.ne.s32.totalorder %s96, %s97
    %p111 = scmp.eq.s32.totalorder %s16, 1
    %p112 = por %p110, %p111
    %p114 = scmp.ne.s32.totalorder %s97, %s113
    %p115 = scmp.eq.s32.totalorder %s16, 0
    %p116 = por %p114, %p115
    %p117 = scmp.le.s32.totalorder 1, %s10
    %p118 = scmp.lt.s32.totalorder %s10, 3
    %p119 = pnand %p117, %p118
    %p120 = pneg %p119
    // Predicated region
    $region9: #{block_forward.2} parent=5 // pred_check
      _
    $region10: #{block_forward.2} parent=5 // pred_check_branch
      %122 = sbr.rel (%p119) target = $region12
    $region11: #{block_forward.2} parent=5 // pred_region
      %s123 = ssub.s32 %s10, 1
      // Predicated region
      $region13: #{block_forward.2} parent=11 // pred_check
        %p124 = pneg %p57
      $region14: #{block_forward.2} parent=11 // pred_check_branch
        %126 = sbr.rel (%p124) target = $region16
      $region15: #{block_forward.2} parent=11 // pred_region
        _
      $region16: #{block_forward.2} parent=11 // pred_fallthru
        _
    $region12: #{block_forward.2} parent=5 // pred_fallthru
      _
    %p127 = scmp.lt.s32.totalorder %s10, 2
    // Predicated region
    $region17: #{block_forward.2} parent=5 // pred_check
      %p128 = pneg %p127
    $region18: #{block_forward.2} parent=5 // pred_check_branch
      %130 = sbr.rel (%p128) target = $region20
    $region19: #{block_forward.2} parent=5 // pred_region
      // Predicated region
      $region21: #{block_forward.2} parent=19 // pred_check
        %p131 = pneg %p30
      $region22: #{block_forward.2} parent=19 // pred_check_branch
        %133 = sbr.rel (%p131) target = $region24
      $region23: #{block_forward.2} parent=19 // pred_region
        %p134 = scmp.lt.s32.totalorder %s10, 1
        %s135 = scalar_select %p134, %s10, 1
        %s136 = smul.addr %s135, 4
        %s137 = scalar_lea.vmem %s0, %s136
      $region24: #{block_forward.2} parent=19 // pred_fallthru
        _
    $region20: #{block_forward.2} parent=5 // pred_fallthru
      _
    %p138 = scmp.le.s32.totalorder 1, %s10
    %p139 = scmp.lt.s32.totalorder %s10, 3
    %p140 = pnand %p138, %p139
    %p141 = pneg %p140
    // Predicated region
    $region25: #{block_forward.2} parent=5 // pred_check
      _
    $region26: #{block_forward.2} parent=5 // pred_check_branch
      %143 = sbr.rel (%p140) target = $region28
    $region27: #{block_forward.2} parent=5 // pred_region
      %s144 = ssub.s32 %s10, 1
      %p145 = scmp.lt.s32.totalorder %s15, 1
      %s146 = scalar_select %p145, %s15, 1
      %s147 = smul.addr %s146, 4
      %s148 = scalar_lea.vmem %s0, %s147
      %p149 = pneg %p36
      %p150 = pneg %p33
      %p151 = pneg %p57
      %p152 = pneg %p54
      %p153 = pneg %p83
      %p154 = pneg %p80
      %p155 = scmp.lt.s32.totalorder %s15, 1
      %s156 = scalar_select %p155, %s15, 1
      %s157 = smul.addr %s156, 8
      %s158 = scalar_lea.vmem %s2, %s157
      %p159 = pneg %p109
      %p160 = pneg %p106
      %p161 = scmp.lt.s32.totalorder %s15, 1
      %s162 = scalar_select %p161, %s15, 1
      %s163 = smul.addr %s162, 8
      %s164 = scalar_lea.vmem %s3, %s163
      %p165 = scmp.lt.s32.totalorder %s15, 1
      %s166 = scalar_select %p165, %s15, 1
      %s167 = smul.addr %s166, 4
      %s168 = scalar_lea.vmem %s0, %s167
      %p169 = scmp.lt.s32.totalorder %s15, 1
      %s170 = scalar_select %p169, %s15, 1
      %s171 = smul.addr %s170, 8
      %s172 = scalar_lea.vmem %s2, %s171
      %p173 = scmp.lt.s32.totalorder %s15, 1
      %s174 = scalar_select %p173, %s15, 1
      %s175 = smul.addr %s174, 8
      %s176 = scalar_lea.vmem %s3, %s175
      %vm177 = vcmask 11264
      %178 = vst.msk [vmem:[#allocation2] sm:$0xf] %vm177, 0.0
      %vm179 = vcmask 3072
      %180 = vst.msk [vmem:[#allocation2 + $0x4] sm:$0xf] %vm179, 0.0
      %vm181 = vcmask 126072
      %182 = vst.msk [vmem:[#allocation2 + $0xc] sm:$0xf] %vm181, 0.0
      %vm183 = vcmask 126064
      %184 = vst.msk [vmem:[#allocation2 + $0x10] sm:$0xf] %vm183, 0.0
      %v185 = vld [vmem:[%s168] sm:$0xf]
      %187 = vrot.lane.b32.xlu0 %v185, 2
      %v188 = vpop.permute.xlu0 %187
      %vm190 = vcmask 125968
      %191 = vst.msk [vmem:[#allocation2] sm:$0xf] %vm190, %v188
      %192 = vrot.lane.b32.xlu0 %v185, 1
      %v193 = vpop.permute.xlu0 %192
      %vm195 = vcmask 125960
      %196 = vst.msk [vmem:[#allocation2 + $0x4] sm:$0xf] %vm195, %v193
      %vm197 = vcmask 125952
      %198 = vst.msk [vmem:[#allocation2 + $0x8] sm:$0xf] %vm197, %v185
      %199 = vrot.lane.b32.xlu0 %v185, 127
      %v200 = vpop.permute.xlu0 %199
      %vm202 = vcmask 117760
      %203 = vst.msk [vmem:[#allocation2 + $0xc] sm:$0xf] %vm202, %v200
      %204 = vrot.lane.b32.xlu0 %v185, 126
      %v205 = vpop.permute.xlu0 %204
      %vm207 = vcmask 109568
      %208 = vst.msk [vmem:[#allocation2 + $0x10] sm:$0xf] %vm207, %v205
      %v209 = vld [vmem:[%s1] sm:$0xff]
      %v210 = vld [vmem:[#allocation2] sm:$0xff]
      %v211 = vld [vmem:[#allocation2 + $0x8] sm:$0xff]
      %v212 = vld [vmem:[#allocation2 + $0x10] sm:$0xf]
      %vm213 = vcmask 162816
      %v215 = vsel %vm213, %v209, 0
      %vm217 = vcmask 1043456
      %v219 = vsel %vm217, %v212, 0
      %221 = vmatprep.subr.mxu0 0.0
      %222 = vmatpush1.msra.mxu0 0.0
      %223 = vmatprep.subr.mxu0 0.0
      %224 = vmatpush1.msra.mxu0 0.0
      %225 = vmatprep.subr.mxu0 0.0
      %226 = vmatpush1.msra.mxu0 0.0
      %227 = vmatprep.subr.mxu0 0.0
      %228 = vmatpush1.msra.mxu0 0.0
      %229 = vmatprep.subr.mxu0 0.0
      %230 = vmatpush1.msra.mxu0 0.0
      %231 = vmatprep.subr.mxu0 0.0
      %232 = vmatpush1.msra.mxu0 0.0
      %233 = vmatprep.subr.mxu0 0.0
      %234 = vmatpush1.msra.mxu0 0.0
      %235 = vmatprep.subr.mxu0 0.0
      %236 = vmatpush1.msra.mxu0 0.0
      %237 = vmatprep.subr.mxu0 0.0
      %238 = vmatpush1.msra.mxu0 0.0
      %239 = vmatprep.subr.mxu0 0.0
      %240 = vmatpush1.msra.mxu0 0.0
      %241 = vmatprep.subr.mxu0 0.0
      %242 = vmatpush1.msra.mxu0 0.0
      %243 = vmatprep.subr.mxu0 0.0
      %244 = vmatpush1.msra.mxu0 0.0
      %245 = vmatprep.subr.mxu0 0.0
      %246 = vmatpush1.msra.mxu0 0.0
      %247 = vmatprep.subr.mxu0 0.0
      %248 = vmatpush1.msra.mxu0 %v219
      %249 = vmatprep.subr.mxu0 0.0
      %250 = vmatpush1.msra.mxu0 %v211
      %251 = vmatprep.subr.mxu0 0.0
      %252 = vmatpush1.msra.mxu0 %v210
      %253 = vmatprep.subr.mxu0 0.0
      %254 = vmatpush2.msra.mxu0 0.0
      %255 = vmatprep.subr.mxu0 0.0
      %256 = vmatpush2.msra.mxu0 0.0
      %257 = vmatprep.subr.mxu0 0.0
      %258 = vmatpush2.msra.mxu0 0.0
      %259 = vmatprep.subr.mxu0 0.0
      %260 = vmatpush2.msra.mxu0 0.0
      %261 = vmatprep.subr.mxu0 0.0
      %262 = vmatpush2.msra.mxu0 0.0
      %263 = vmatprep.subr.mxu0 0.0
      %264 = vmatpush2.msra.mxu0 0.0
      %265 = vmatprep.subr.mxu0 0.0
      %266 = vmatpush2.msra.mxu0 0.0
      %267 = vmatprep.subr.mxu0 0.0
      %268 = vmatpush2.msra.mxu0 0.0
      %269 = vmatprep.subr.mxu0 0.0
      %270 = vmatpush2.msra.mxu0 0.0
      %271 = vmatprep.subr.mxu0 0.0
      %272 = vmatpush2.msra.mxu0 0.0
      %273 = vmatprep.subr.mxu0 0.0
      %274 = vmatpush2.msra.mxu0 0.0
      %275 = vmatprep.subr.mxu0 0.0
      %276 = vmatpush2.msra.mxu0 0.0
      %277 = vmatprep.subr.mxu0 0.0
      %278 = vmatpush2.msra.mxu0 0.0
      %279 = vmatprep.subr.mxu0 0.0
      %280 = vmatpush2.msra.mxu0 0.0
      %281 = vmatprep.subr.mxu0 0.0
      %282 = vmatpush2.msra.mxu0 0.0
      %283 = vmatprep.subr.mxu0 0.0
      %284 = vmatpush2.msra.mxu0 0.0
      %285 = vmatprep.mubr.f32.mxu0 0.0
      %286 = vmatmul.mubr.f32.gmra.mxu0 %v215
      %v287 = vpop.f32.mrf.mxu0
      %v288 = vadd.f32 0.0, %v287
      %v289 = vpop.f32.mrf.mxu0
      %290 = vdwg.mxu0
      %vm291 = vcmask 130048
      %v292 = vsel %vm291, %v288, 0.0
      %293 = vadd.xlane.f32.xlu0 %v292
      %v294 = vpop.xlane.xlu0 %293
      %v295 = vmul.f32 %v294, 0.0625
      %v296 = vsub.f32 %v288, %v295
      %vm297 = vcmask 7168
      %298 = vst.msk [vmem:[%s172] sm:$0xff] %vm297, %v294
      %v299 = vmul.f32 %v296, %v296
      %v300 = vsel %vm291, %v299, 0.0
      %301 = vadd.xlane.f32.xlu0 %v300
      %v302 = vpop.xlane.xlu0 %301
      %303 = vst.msk [vmem:[%s176] sm:$0xff] %vm297, %v302
      %p304 = scmp.lt.s32.totalorder %s15, 1
      %s305 = scalar_select %p304, %s15, 1
      %s306 = smul.addr %s305, 8
      %s307 = scalar_lea.vmem %s2, %s306
      %p308 = scmp.lt.s32.totalorder %s15, 1
      %s309 = scalar_select %p308, %s15, 1
      %s310 = smul.addr %s309, 8
      %s311 = scalar_lea.vmem %s3, %s310
      // Predicated region
      $region29: #{block_forward.2} parent=27 // pred_check
        %p312 = pneg %p80
      $region30: #{block_forward.2} parent=27 // pred_check_branch
        %314 = sbr.rel (%p312) target = $region32
      $region31: #{block_forward.2} parent=27 // pred_region
        _
      $region32: #{block_forward.2} parent=27 // pred_fallthru
        _
      // Predicated region
      $region33: #{block_forward.2} parent=27 // pred_check
        %p315 = pneg %p106
      $region34: #{block_forward.2} parent=27 // pred_check_branch
        %317 = sbr.rel (%p315) target = $region36
      $region35: #{block_forward.2} parent=27 // pred_region
        _
      $region36: #{block_forward.2} parent=27 // pred_fallthru
        _
    $region28: #{block_forward.2} parent=5 // pred_fallthru
      _
    %p318 = scmp.le.s32.totalorder 2, %s10
    // Predicated region
    $region37: #{block_forward.2} parent=5 // pred_check
      %p319 = pneg %p318
    $region38: #{block_forward.2} parent=5 // pred_check_branch
      %321 = sbr.rel (%p319) target = $region40
    $region39: #{block_forward.2} parent=5 // pred_region
      %s322 = ssub.s32 %s10, 2
      // Predicated region
      $region41: #{block_forward.2} parent=39 // pred_check
        %p323 = pneg %p86
      $region42: #{block_forward.2} parent=39 // pred_check_branch
        %325 = sbr.rel (%p323) target = $region44
      $region43: #{block_forward.2} parent=39 // pred_region
        %p326 = scmp.lt.s32.totalorder %s16, 1
        %s327 = scalar_select %p326, %s16, 1
        %s328 = smul.addr %s327, 8
        %s329 = scalar_lea.vmem %s2, %s328
      $region44: #{block_forward.2} parent=39 // pred_fallthru
        _
      // Predicated region
      $region45: #{block_forward.2} parent=39 // pred_check
        %p330 = pneg %p112
      $region46: #{block_forward.2} parent=39 // pred_check_branch
        %332 = sbr.rel (%p330) target = $region48
      $region47: #{block_forward.2} parent=39 // pred_region
        %p333 = scmp.lt.s32.totalorder %s16, 1
        %s334 = scalar_select %p333, %s16, 1
        %s335 = smul.addr %s334, 8
        %s336 = scalar_lea.vmem %s3, %s335
      $region48: #{block_forward.2} parent=39 // pred_fallthru
        _
    $region40: #{block_forward.2} parent=5 // pred_fallthru
      _
  $region6: #{block_forward.2} parent=0 // loop_footer
    %s14 = sadd.s32 1, %s10
  $region7: #{block_forward.2} parent=0 // loop_footer_branch
    %9 = sbr.rel target = $region3
  $region8: #{block_forward.2} parent=0 // loop_exit
    _

// kernel: block_forward.3
$region0: #{block_forward.3}
  #allocation0 [shape = 'u32[]', space=smem, size = 0x4, offset = 0x4, fixed_abs, tag = 'smem constant byte address 0x4 - core index']
  #allocation1 [shape = 'u32[144,128]{1,0:T(1,128)}', space=vmem, size = 0x12000, scoped, tag = 'internal scratch']
  #allocation2 [shape = 'f32[20,16]{1,0:T(8,128)}', space=vmem, size = 0x3000, scoped, tag = 'scratch operand']
  %s0 = inlined_call_operand.vmem [shape: f32[2,4,16], index: 0, kind: input, shape index: {}]
  %s1 = inlined_call_operand.vmem [shape: f32[8,20], index: 1, kind: input, shape index: {}]
  %s2 = inlined_call_operand.vmem [shape: f32[8,1], index: 2, kind: input, shape index: {}]
  %s3 = inlined_call_operand.hbm [shape: f32[2,8,16], index: 3, kind: output, shape index: {}]
  %s4 = sld [smem:[#allocation0]]
  $region45: #{block_forward.3} parent=0
    _
  %s6 = ssub.s32 1, %s4
  %s7 = scalar_select 0, %s6, %s4
  $region1: #{block_forward.3} parent=0
    #allocation3 [shape = 'u8[8192]{0}', space=vmem, size = 0x2000, scoped, tag = 'output window, operand 0']
    #allocation4 [shape = 's32[2]{0}', space=sflag, size = 0x8, scoped, tag = 'scoped memory for block_forward.3']
    %8 = vsyncpa [#allocation4], 0
    %s9 = scalar_lea.sflag [#allocation4], 1
    %10 = vsyncpa %s9, 0
    loop: start=0, step=1, limit=4
    $region2: #{block_forward.3} parent=1 // loop_pre_header
      _
    $region3: #{block_forward.3} parent=1 // loop_header
      %s12 = sphi 0, %s16
      %p13 = scmp.ge.s32.totalorder %s12, 4
      %s22 = sphi 0, %s24
      %s25 = sphi 0, %s22
      %s26 = sphi 0, %s25
      %s42 = sphi 0, %s26
      %s46 = sphi 0, %s46
      %s48 = sphi 0, %s46
      %s49 = sphi 0, %s48
      %s63 = sphi 0, %s49
      %s67 = sphi 0, %s67
      %s69 = sphi 0, %s67
      %s70 = sphi 0, %s69
      %s84 = sphi 0, %s70
      %s90 = sphi 0, %s92
      %s93 = sphi 0, %s90
      %s94 = sphi 0, %s93
      %s110 = sphi 0, %s94
    $region4: #{block_forward.3} parent=1 // loop_header_branch
      %15 = sbr.rel (%p13) target = $region8
    $region5: #{block_forward.3} parent=1 // loop_body
      %s17 = ssub.s32 %s12, 1
      %s18 = ssub.s32 %s12, 2
      %s19 = sadd.s32 %s12, 1
      %s20 = ssub.s32 %s12, %s19
      %p21 = scmp.eq.s32.totalorder %s20, 0
      %s23 = sadd.s32 %s22, 1
      %s24 = scalar_select %p21, %s22, %s23
      %p27 = pneg %p21
      %p28 = scmp.eq.s32.totalorder %s12, 1
      %p29 = por %p27, %p28
      %p30 = scmp.ne.s32.totalorder %s22, %s25
      %p31 = scmp.eq.s32.totalorder %s12, 0
      %p32 = por %p30, %p31
      %p33 = scmp.ne.s32.totalorder %s22, %s25
      %p34 = scmp.eq.s32.totalorder %s17, 1
      %p35 = por %p33, %p34
      %p36 = scmp.ne.s32.totalorder %s25, %s26
      %p37 = scmp.eq.s32.totalorder %s17, 0
      %p38 = por %p36, %p37
      %p39 = scmp.ne.s32.totalorder %s25, %s26
      %p40 = scmp.eq.s32.totalorder %s18, 1
      %p41 = por %p39, %p40
      %p43 = scmp.ne.s32.totalorder %s26, %s42
      %p44 = scmp.eq.s32.totalorder %s18, 0
      %p45 = por %p43, %p44
      %s47 = sadd.s32 %s46, 1
      %p50 = scmp.eq.s32.totalorder %s12, 1
      %p51 = scmp.ne.s32.totalorder %s46, %s48
      %p52 = scmp.eq.s32.totalorder %s12, 0
      %p53 = por %p51, %p52
      %p54 = scmp.ne.s32.totalorder %s46, %s48
      %p55 = scmp.eq.s32.totalorder %s17, 1
      %p56 = por %p54, %p55
      %p57 = scmp.ne.s32.totalorder %s48, %s49
      %p58 = scmp.eq.s32.totalorder %s17, 0
      %p59 = por %p57, %p58
      %p60 = scmp.ne.s32.totalorder %s48, %s49
      %p61 = scmp.eq.s32.totalorder %s18, 1
      %p62 = por %p60, %p61
      %p64 = scmp.ne.s32.totalorder %s49, %s63
      %p65 = scmp.eq.s32.totalorder %s18, 0
      %p66 = por %p64, %p65
      %s68 = sadd.s32 %s67, 1
      %p71 = scmp.eq.s32.totalorder %s12, 1
      %p72 = scmp.ne.s32.totalorder %s67, %s69
      %p73 = scmp.eq.s32.totalorder %s12, 0
      %p74 = por %p72, %p73
      %p75 = scmp.ne.s32.totalorder %s67, %s69
      %p76 = scmp.eq.s32.totalorder %s17, 1
      %p77 = por %p75, %p76
      %p78 = scmp.ne.s32.totalorder %s69, %s70
      %p79 = scmp.eq.s32.totalorder %s17, 0
      %p80 = por %p78, %p79
      %p81 = scmp.ne.s32.totalorder %s69, %s70
      %p82 = scmp.eq.s32.totalorder %s18, 1
      %p83 = por %p81, %p82
      %p85 = scmp.ne.s32.totalorder %s70, %s84
      %p86 = scmp.eq.s32.totalorder %s18, 0
      %p87 = por %p85, %p86
      %s88 = ssub.s32 %s12, %s19
      %p89 = scmp.eq.s32.totalorder %s88, 0
      %s91 = sadd.s32 %s90, 1
      %s92 = scalar_select %p89, %s90, %s91
      %p95 = pneg %p89
      %p96 = scmp.eq.s32.totalorder %s12, 1
      %p97 = por %p95, %p96
      %p98 = scmp.ne.s32.totalorder %s90, %s93
      %p99 = scmp.eq.s32.totalorder %s12, 0
      %p100 = por %p98, %p99
      %p101 = scmp.ne.s32.totalorder %s90, %s93
      %p102 = scmp.eq.s32.totalorder %s17, 1
      %p103 = por %p101, %p102
      %p104 = scmp.ne.s32.totalorder %s93, %s94
      %p105 = scmp.eq.s32.totalorder %s17, 0
      %p106 = por %p104, %p105
      %p107 = scmp.ne.s32.totalorder %s93, %s94
      %p108 = scmp.eq.s32.totalorder %s18, 1
      %p109 = por %p107, %p108
      %p111 = scmp.ne.s32.totalorder %s94, %s110
      %p112 = scmp.eq.s32.totalorder %s18, 0
      %p113 = por %p111, %p112
      %p114 = scmp.le.s32.totalorder 1, %s12
      %p115 = scmp.lt.s32.totalorder %s12, 3
      %p116 = pnand %p114, %p115
      %p117 = pneg %p116
      // Predicated region
      $region9: #{block_forward.3} parent=5 // pred_check
        _
      $region10: #{block_forward.3} parent=5 // pred_check_branch
        %119 = sbr.rel (%p116) target = $region12
      $region11: #{block_forward.3} parent=5 // pred_region
        %s120 = ssub.s32 %s12, 1
        // Predicated region
        $region13: #{block_forward.3} parent=11 // pred_check
          %p121 = pneg %p59
        $region14: #{block_forward.3} parent=11 // pred_check_branch
          %123 = sbr.rel (%p121) target = $region16
        $region15: #{block_forward.3} parent=11 // pred_region
          _
        $region16: #{block_forward.3} parent=11 // pred_fallthru
          _
        // Predicated region
        $region17: #{block_forward.3} parent=11 // pred_check
          %p124 = pneg %p80
        $region18: #{block_forward.3} parent=11 // pred_check_branch
          %126 = sbr.rel (%p124) target = $region20
        $region19: #{block_forward.3} parent=11 // pred_region
          _
        $region20: #{block_forward.3} parent=11 // pred_fallthru
          _
      $region12: #{block_forward.3} parent=5 // pred_fallthru
        _
      %p127 = scmp.lt.s32.totalorder %s12, 2
      // Predicated region
      $region21: #{block_forward.3} parent=5 // pred_check
        %p128 = pneg %p127
      $region22: #{block_forward.3} parent=5 // pred_check_branch
        %130 = sbr.rel (%p128) target = $region24
      $region23: #{block_forward.3} parent=5 // pred_region
        // Predicated region
        $region25: #{block_forward.3} parent=23 // pred_check
          %p131 = pneg %p32
        $region26: #{block_forward.3} parent=23 // pred_check_branch
          %133 = sbr.rel (%p131) target = $region28
        $region27: #{block_forward.3} parent=23 // pred_region
          %p134 = scmp.lt.s32.totalorder %s12, 1
          %s135 = scalar_select %p134, %s12, 1
          %s136 = smul.addr %s135, 4
          %s137 = scalar_lea.vmem %s0, %s136
        $region28: #{block_forward.3} parent=23 // pred_fallthru
          _
      $region24: #{block_forward.3} parent=5 // pred_fallthru
        _
      %p138 = scmp.le.s32.totalorder 1, %s12
      %p139 = scmp.lt.s32.totalorder %s12, 3
      %p140 = pnand %p138, %p139
      %p141 = pneg %p140
      // Predicated region
      $region29: #{block_forward.3} parent=5 // pred_check
        _
      $region30: #{block_forward.3} parent=5 // pred_check_branch
        %143 = sbr.rel (%p140) target = $region32
      $region31: #{block_forward.3} parent=5 // pred_region
        %s144 = ssub.s32 %s12, 1
        %p145 = scmp.lt.s32.totalorder %s17, 1
        %s146 = scalar_select %p145, %s17, 1
        %s147 = smul.addr %s146, 4
        %s148 = scalar_lea.vmem %s0, %s147
        %p149 = pneg %p38
        %p150 = pneg %p35
        %p151 = pneg %p59
        %p152 = pneg %p56
        %p153 = pneg %p80
        %p154 = pneg %p77
        %p155 = pneg %p106
        %p156 = pneg %p103
        %s157 = sand.u32 %s93, 1
        %s158 = scalar_lea.sflag [#allocation4], %s157
        %s159 = sand.u32 %s93, 1
        %s160 = smul.addr %s159, 8
        %s161 = scalar_lea.vmem [#allocation3], %s160
        %p162 = scmp.lt.s32.totalorder %s17, 1
        %s163 = scalar_select %p162, %s17, 1
        %s164 = smul.addr %s163, 4
        %s165 = scalar_lea.vmem %s0, %s164
        %vm166 = vcmask 11264
        %167 = vst.msk [vmem:[#allocation2] sm:$0xf] %vm166, 0.0
        %vm168 = vcmask 3072
        %169 = vst.msk [vmem:[#allocation2 + $0x4] sm:$0xf] %vm168, 0.0
        %vm170 = vcmask 126072
        %171 = vst.msk [vmem:[#allocation2 + $0xc] sm:$0xf] %vm170, 0.0
        %vm172 = vcmask 126064
        %173 = vst.msk [vmem:[#allocation2 + $0x10] sm:$0xf] %vm172, 0.0
        %v174 = vld [vmem:[%s165] sm:$0xf]
        %176 = vrot.lane.b32.xlu0 %v174, 2
        %v177 = vpop.permute.xlu0 %176
        %vm179 = vcmask 125968
        %180 = vst.msk [vmem:[#allocation2] sm:$0xf] %vm179, %v177
        %181 = vrot.lane.b32.xlu0 %v174, 1
        %v182 = vpop.permute.xlu0 %181
        %vm184 = vcmask 125960
        %185 = vst.msk [vmem:[#allocation2 + $0x4] sm:$0xf] %vm184, %v182
        %vm186 = vcmask 125952
        %187 = vst.msk [vmem:[#allocation2 + $0x8] sm:$0xf] %vm186, %v174
        %188 = vrot.lane.b32.xlu0 %v174, 127
        %v189 = vpop.permute.xlu0 %188
        %vm191 = vcmask 117760
        %192 = vst.msk [vmem:[#allocation2 + $0xc] sm:$0xf] %vm191, %v189
        %193 = vrot.lane.b32.xlu0 %v174, 126
        %v194 = vpop.permute.xlu0 %193
        %vm196 = vcmask 109568
        %197 = vst.msk [vmem:[#allocation2 + $0x10] sm:$0xf] %vm196, %v194
        %v198 = vld [vmem:[%s1] sm:$0xff]
        %v199 = vld [vmem:[#allocation2] sm:$0xff]
        %v200 = vld [vmem:[#allocation2 + $0x8] sm:$0xff]
        %v201 = vld [vmem:[#allocation2 + $0x10] sm:$0xf]
        %v202 = vld [vmem:[%s2] sm:$0xff]
        %204 = vset.pattern.permute.xlu0 0
        %205 = vperm.xlu0 %204, %v202
        %v206 = vpop.permute.xlu0 %205
        %vm208 = vcmask 162816
        %v210 = vsel %vm208, %v198, 0
        %vm212 = vcmask 1043456
        %v214 = vsel %vm212, %v201, 0
        %216 = vmatprep.subr.mxu0 0.0
        %217 = vmatpush1.msra.mxu0 0.0
        %218 = vmatprep.subr.mxu0 0.0
        %219 = vmatpush1.msra.mxu0 0.0
        %220 = vmatprep.subr.mxu0 0.0
        %221 = vmatpush1.msra.mxu0 0.0
        %222 = vmatprep.subr.mxu0 0.0
        %223 = vmatpush1.msra.mxu0 0.0
        %224 = vmatprep.subr.mxu0 0.0
        %225 = vmatpush1.msra.mxu0 0.0
        %226 = vmatprep.subr.mxu0 0.0
        %227 = vmatpush1.msra.mxu0 0.0
        %228 = vmatprep.subr.mxu0 0.0
        %229 = vmatpush1.msra.mxu0 0.0
        %230 = vmatprep.subr.mxu0 0.0
        %231 = vmatpush1.msra.mxu0 0.0
        %232 = vmatprep.subr.mxu0 0.0
        %233 = vmatpush1.msra.mxu0 0.0
        %234 = vmatprep.subr.mxu0 0.0
        %235 = vmatpush1.msra.mxu0 0.0
        %236 = vmatprep.subr.mxu0 0.0
        %237 = vmatpush1.msra.mxu0 0.0
        %238 = vmatprep.subr.mxu0 0.0
        %239 = vmatpush1.msra.mxu0 0.0
        %240 = vmatprep.subr.mxu0 0.0
        %241 = vmatpush1.msra.mxu0 0.0
        %242 = vmatprep.subr.mxu0 0.0
        %243 = vmatpush1.msra.mxu0 %v214
        %244 = vmatprep.subr.mxu0 0.0
        %245 = vmatpush1.msra.mxu0 %v200
        %246 = vmatprep.subr.mxu0 0.0
        %247 = vmatpush1.msra.mxu0 %v199
        %248 = vmatprep.subr.mxu0 0.0
        %249 = vmatpush2.msra.mxu0 0.0
        %250 = vmatprep.subr.mxu0 0.0
        %251 = vmatpush2.msra.mxu0 0.0
        %252 = vmatprep.subr.mxu0 0.0
        %253 = vmatpush2.msra.mxu0 0.0
        %254 = vmatprep.subr.mxu0 0.0
        %255 = vmatpush2.msra.mxu0 0.0
        %256 = vmatprep.subr.mxu0 0.0
        %257 = vmatpush2.msra.mxu0 0.0
        %258 = vmatprep.subr.mxu0 0.0
        %259 = vmatpush2.msra.mxu0 0.0
        %260 = vmatprep.subr.mxu0 0.0
        %261 = vmatpush2.msra.mxu0 0.0
        %262 = vmatprep.subr.mxu0 0.0
        %263 = vmatpush2.msra.mxu0 0.0
        %264 = vmatprep.subr.mxu0 0.0
        %265 = vmatpush2.msra.mxu0 0.0
        %266 = vmatprep.subr.mxu0 0.0
        %267 = vmatpush2.msra.mxu0 0.0
        %268 = vmatprep.subr.mxu0 0.0
        %269 = vmatpush2.msra.mxu0 0.0
        %270 = vmatprep.subr.mxu0 0.0
        %271 = vmatpush2.msra.mxu0 0.0
        %272 = vmatprep.subr.mxu0 0.0
        %273 = vmatpush2.msra.mxu0 0.0
        %274 = vmatprep.subr.mxu0 0.0
        %275 = vmatpush2.msra.mxu0 0.0
        %276 = vmatprep.subr.mxu0 0.0
        %277 = vmatpush2.msra.mxu0 0.0
        %278 = vmatprep.subr.mxu0 0.0
        %279 = vmatpush2.msra.mxu0 0.0
        %280 = vmatprep.mubr.f32.mxu0 0.0
        %281 = vmatmul.mubr.f32.gmra.mxu0 %v210
        %v282 = vpop.f32.mrf.mxu0
        %v283 = vadd.f32 %v206, %v282
        %v284 = vpop.f32.mrf.mxu0
        %285 = vdwg.mxu0
        %v286 = vmax.f32 %v283, 0.0
        %vm287 = vcmask 130048
        %288 = vst.msk [vmem:[%s161] sm:$0xff] %vm287, %v286
        %s289 = sand.u32 %s93, 1
        %s290 = scalar_lea.sflag [#allocation4], %s289
        %s291 = sand.u32 %s93, 1
        %s292 = smul.addr %s291, 8
        %s293 = scalar_lea.vmem [#allocation3], %s292
        // Predicated region
        $region33: #{block_forward.3} parent=31 // pred_check
          %p294 = pneg %p103
        $region34: #{block_forward.3} parent=31 // pred_check_branch
          %296 = sbr.rel (%p294) target = $region36
        $region35: #{block_forward.3} parent=31 // pred_region
          %s298 = ssub.s32 128, 128
          %299 = vsyncadd %s290, %s298
          %s300 = smul.addr %s17, 128
          %s301 = scalar_lea.hbm %s3, %s300
          %s303 = sshll.u32 %s293, 4
          %s304 = int_to_ptr.vmem [resolvable:$true] %s303
          %306 = dma.vmem_to_hbm [thread:$0]  %s304, 128, %s301, %s290
        $region36: #{block_forward.3} parent=31 // pred_fallthru
          _
      $region32: #{block_forward.3} parent=5 // pred_fallthru
        _
      %p307 = scmp.le.s32.totalorder 2, %s12
      // Predicated region
      $region37: #{block_forward.3} parent=5 // pred_check
        %p308 = pneg %p307
      $region38: #{block_forward.3} parent=5 // pred_check_branch
        %310 = sbr.rel (%p308) target = $region40
      $region39: #{block_forward.3} parent=5 // pred_region
        %s311 = ssub.s32 %s12, 2
        // Predicated region
        $region41: #{block_forward.3} parent=39 // pred_check
          %p312 = pneg %p109
        $region42: #{block_forward.3} parent=39 // pred_check_branch
          %314 = sbr.rel (%p312) target = $region44
        $region43: #{block_forward.3} parent=39 // pred_region
          %s315 = sand.u32 %s94, 1
          %s316 = scalar_lea.sflag [#allocation4], %s315
          %s317 = sand.u32 %s94, 1
          %s318 = smul.addr %s317, 8
          %s319 = scalar_lea.vmem [#allocation3], %s318
          %320 = dma.done %s316, 128
        $region44: #{block_forward.3} parent=39 // pred_fallthru
          _
      $region40: #{block_forward.3} parent=5 // pred_fallthru
        _
    $region6: #{block_forward.3} parent=1 // loop_footer
      %s16 = sadd.s32 1, %s12
    $region7: #{block_forward.3} parent=1 // loop_footer_branch
      %11 = sbr.rel target = $region3
    $region8: #{block_forward.3} parent=1 // loop_exit
      _
    %321 = vsyncpa [#allocation4], 1
    %s322 = scalar_lea.sflag [#allocation4], 1
    %323 = vsyncpa %s322, 1

</llo_original>
